<compile_context>
chip_gen: v5e
topology: v5e:2x2
jax: 0.10.0
libtpu: 0.0.40
codegen_flags: <defaults>
</compile_context>

<pallas_src>
import jax
import jax.numpy as jnp
from jax.experimental import pallas as pl
from jax.experimental.pallas import tpu as pltpu


def _round_up(x, m):
    return ((x + m - 1) // m) * m


def _ds_conv_kernel(x_ref, w_ref, b_ref, o_ref):
    """Fused pad + 3x3 stride-2 conv for one batch element.

    x_ref : (1, 4, HOp, WOp, C)  bf16  space-to-depth parity planes
    w_ref : (3, 3, C, Cp)        bf16  conv weight (kh, kw, cin, cout_padded)
    b_ref : (1, Cp)              f32   bias (zero-padded to Cp)
    o_ref : (1, HO, WO, Cp)      f32   output (lane-dense last dim Cp)
    """
    _, ho, wo, cp = o_ref.shape
    c = x_ref.shape[-1]

    acc = jnp.zeros((ho * wo, cp), dtype=jnp.float32)
    for kh in range(3):
        for kw in range(3):
            plane = 2 * (kh % 2) + (kw % 2)          # static parity plane index
            patch = x_ref[0, plane,
                          kh // 2: kh // 2 + ho,
                          kw // 2: kw // 2 + wo, :]  # (HO, WO, C) contiguous
            acc = acc + jnp.dot(patch.reshape(ho * wo, c),
                                w_ref[kh, kw],
                                preferred_element_type=jnp.float32)
    acc = acc + b_ref[...]                           # (1, Cp) broadcast
    o_ref[0] = acc.reshape(ho, wo, cp).astype(o_ref.dtype)


def downsample_block_forward(x_nchw, weight, bias):
    """Pallas implementation of DownSampleBlock.forward.

    x_nchw : (N, C, H, W) float32
    weight : (C, C, 3, 3) float32  (PyTorch Conv2d layout: Cout, Cin, KH, KW)
    bias   : (C,) float32
    returns: (N, C, HO, WO) float32 with HO = (H - 2) // 2 + 1 (after pad-by-1)
    """
    N, C, H, W = x_nchw.shape
    KH = KW = 3
    stride = 2

    HO = (H + 1 - KH) // stride + 1
    WO = (W + 1 - KW) // stride + 1
    HOp, WOp = HO + 1, WO + 1
    pad_h = 2 * HOp - H          # >= 1; includes the module's bottom zero-pad
    pad_w = 2 * WOp - W          # >= 1; includes the module's right zero-pad
    Cp = _round_up(C, 128)       # lane-dense output / MXU N dimension

    # --- glue: pad + space-to-depth (single relayout pass, no 9x im2col) ---
    x_pad = jnp.pad(x_nchw, ((0, 0), (0, 0), (0, pad_h), (0, pad_w)))
    x_r = x_pad.reshape(N, C, HOp, 2, WOp, 2)
    # -> (N, h-parity, w-parity, HOp, WOp, C) -> merge parities
    x_s2d = jnp.transpose(x_r, (0, 3, 5, 2, 4, 1)).reshape(N, 4, HOp, WOp, C)
    x_s2d = x_s2d.astype(jnp.bfloat16)

    # weight (Cout, Cin, KH, KW) -> (KH, KW, Cin, Cp) bf16 ; bias -> (1, Cp) f32
    w = jnp.transpose(weight, (2, 3, 1, 0))
    w = jnp.pad(w, ((0, 0), (0, 0), (0, 0), (0, Cp - C))).astype(jnp.bfloat16)
    b = jnp.pad(bias.astype(jnp.float32), (0, Cp - C)).reshape(1, Cp)

    out = pl.pallas_call(
        _ds_conv_kernel,
        out_shape=jax.ShapeDtypeStruct((N, HO, WO, Cp), jnp.float32),
        grid_spec=pltpu.PrefetchScalarGridSpec(
            num_scalar_prefetch=0,
            grid=(N,),
            in_specs=[
                pl.BlockSpec((1, 4, HOp, WOp, C), lambda n: (n, 0, 0, 0, 0)),
                pl.BlockSpec((KH, KW, C, Cp), lambda n: (0, 0, 0, 0)),
                pl.BlockSpec((1, Cp), lambda n: (0, 0)),
            ],
            out_specs=pl.BlockSpec((1, HO, WO, Cp), lambda n: (n, 0, 0, 0)),
        ),
        compiler_params=pltpu.CompilerParams(
            dimension_semantics=("parallel",),
            vmem_limit_bytes=48 * 1024 * 1024,
        ),
    )(x_s2d, w, b)

    out = out[..., :C]                          # drop Cout padding
    # TODO(synk): keep activations NHWC across the surrounding model so this
    # NCHW<->NHWC transpose (and the one above) can be removed entirely.
    return jnp.transpose(out, (0, 3, 1, 2))     # back to NCHW


def _reference_forward(x_nchw, weight, bias):
    """Pure-JAX reference using lax.conv (matches PyTorch semantics)."""
    x_pad = jnp.pad(x_nchw, ((0, 0), (0, 0), (0, 1), (0, 1)))
    y = jax.lax.conv_general_dilated(
        x_pad, weight,
        window_strides=(2, 2), padding="VALID",
        dimension_numbers=("NCHW", "OIHW", "NCHW"))
    return y + bias.reshape(1, -1, 1, 1)


if __name__ == "__main__":
    key = jax.random.PRNGKey(0)
    kx, kw_key, kb_key = jax.random.split(key, 3)

    N, C, H, W = 2, 4, 16, 16
    x = jax.random.normal(kx, (N, C, H, W), dtype=jnp.float32)

    # deterministic synthetic Conv2d(C, C, 3, stride=2, pad=0) parameters
    fan_in = C * 3 * 3
    bound = 1.0 / (fan_in ** 0.5)
    weight = jax.random.uniform(kw_key, (C, C, 3, 3), minval=-bound,
                                maxval=bound, dtype=jnp.float32)
    bias = jax.random.uniform(kb_key, (C,), minval=-bound, maxval=bound,
                              dtype=jnp.float32)

    y = jax.block_until_ready(downsample_block_forward(x, weight, bias))

    HO = (H - 2) // 2 + 1
    WO = (W - 2) // 2 + 1
    assert y.shape == (N, C, HO, WO), y.shape

    # Reference with the same bf16 rounding applied to the streamed operands
    # (kernel multiplies bf16 operands exactly, accumulates in f32), so the
    # tolerance can stay tight.
    x_r = x.astype(jnp.bfloat16).astype(jnp.float32)
    w_r = weight.astype(jnp.bfloat16).astype(jnp.float32)
    y_ref = _reference_forward(x_r, w_r, bias)
    err = float(jnp.max(jnp.abs(y - y_ref)))
    assert err < 1e-3, err

    print("KERNEL_OK")
</pallas_src>

<mosaic_0001>
module attributes {stable_mosaic.version = 11 : i64} {
  func.func @_ds_conv_kernel(%arg0: i32, %arg1: memref<1x4x9x9x4xbf16, #tpu.memory_space<vmem>>, %arg2: memref<3x3x4x128xbf16, #tpu.memory_space<vmem>>, %arg3: memref<1x128xf32, #tpu.memory_space<vmem>>, %arg4: memref<1x8x8x128xf32, #tpu.memory_space<vmem>>) attributes {dimension_semantics = [#tpu.dimension_semantics<parallel>], iteration_bounds = array<i64: 2>, scalar_prefetch = 0 : i64, scratch_operands = 0 : i64, tpu.core_type = #tpu.core_type<tc>, window_params = [{transform_indices = @transform_0, window_bounds = array<i64: 1, 4, 9, 9, 4>}, {pipeline_mode = #tpu.pipeline_mode<synchronous>, transform_indices = @transform_1, window_bounds = array<i64: 3, 3, 4, 128>}, {pipeline_mode = #tpu.pipeline_mode<synchronous>, transform_indices = @transform_2, window_bounds = array<i64: 1, 128>}, {transform_indices = @transform_3, window_bounds = array<i64: 1, 8, 8, 128>}]} {
    %cst = arith.constant 0.000000e+00 : f32
    %0 = vector.broadcast %cst : f32 to vector<64x128xf32>
    %c0 = arith.constant 0 : index
    %c0_0 = arith.constant 0 : index
    %c0_1 = arith.constant 0 : index
    %c0_2 = arith.constant 0 : index
    %c0_3 = arith.constant 0 : index
    %1 = vector.load %arg1[%c0, %c0_0, %c0_1, %c0_2, %c0_3] : memref<1x4x9x9x4xbf16, #tpu.memory_space<vmem>>, vector<1x1x8x8x4xbf16>
    %2 = vector.shape_cast %1 : vector<1x1x8x8x4xbf16> to vector<8x8x4xbf16>
    %3 = vector.shape_cast %2 : vector<8x8x4xbf16> to vector<64x4xbf16>
    %c0_4 = arith.constant 0 : index
    %c0_5 = arith.constant 0 : index
    %c0_6 = arith.constant 0 : index
    %c0_7 = arith.constant 0 : index
    %4 = vector.load %arg2[%c0_4, %c0_5, %c0_6, %c0_7] : memref<3x3x4x128xbf16, #tpu.memory_space<vmem>>, vector<1x1x4x128xbf16>
    %5 = vector.shape_cast %4 : vector<1x1x4x128xbf16> to vector<4x128xbf16>
    %cst_8 = arith.constant dense<0.000000e+00> : vector<64x128xf32>
    %6 = tpu.matmul %3, %5, %cst_8 {dimension_numbers = #tpu.dot_dimension_numbers<[1], [0], [0], [1], [0, 0, 1, 1], [], []>} : vector<64x4xbf16>, vector<4x128xbf16>, vector<64x128xf32> -> vector<64x128xf32>
    %7 = arith.addf %0, %6 : vector<64x128xf32>
    %c0_9 = arith.constant 0 : index
    %c1 = arith.constant 1 : index
    %c0_10 = arith.constant 0 : index
    %c0_11 = arith.constant 0 : index
    %c0_12 = arith.constant 0 : index
    %8 = vector.load %arg1[%c0_9, %c1, %c0_10, %c0_11, %c0_12] : memref<1x4x9x9x4xbf16, #tpu.memory_space<vmem>>, vector<1x1x8x8x4xbf16>
    %9 = vector.shape_cast %8 : vector<1x1x8x8x4xbf16> to vector<8x8x4xbf16>
    %10 = vector.shape_cast %9 : vector<8x8x4xbf16> to vector<64x4xbf16>
    %c0_13 = arith.constant 0 : index
    %c1_14 = arith.constant 1 : index
    %c0_15 = arith.constant 0 : index
    %c0_16 = arith.constant 0 : index
    %11 = vector.load %arg2[%c0_13, %c1_14, %c0_15, %c0_16] : memref<3x3x4x128xbf16, #tpu.memory_space<vmem>>, vector<1x1x4x128xbf16>
    %12 = vector.shape_cast %11 : vector<1x1x4x128xbf16> to vector<4x128xbf16>
    %cst_17 = arith.constant dense<0.000000e+00> : vector<64x128xf32>
    %13 = tpu.matmul %10, %12, %cst_17 {dimension_numbers = #tpu.dot_dimension_numbers<[1], [0], [0], [1], [0, 0, 1, 1], [], []>} : vector<64x4xbf16>, vector<4x128xbf16>, vector<64x128xf32> -> vector<64x128xf32>
    %14 = arith.addf %7, %13 : vector<64x128xf32>
    %c0_18 = arith.constant 0 : index
    %c0_19 = arith.constant 0 : index
    %c0_20 = arith.constant 0 : index
    %c1_21 = arith.constant 1 : index
    %c0_22 = arith.constant 0 : index
    %15 = vector.load %arg1[%c0_18, %c0_19, %c0_20, %c1_21, %c0_22] : memref<1x4x9x9x4xbf16, #tpu.memory_space<vmem>>, vector<1x1x8x8x4xbf16>
    %16 = vector.shape_cast %15 : vector<1x1x8x8x4xbf16> to vector<8x8x4xbf16>
    %17 = vector.shape_cast %16 : vector<8x8x4xbf16> to vector<64x4xbf16>
    %c0_23 = arith.constant 0 : index
    %c2 = arith.constant 2 : index
    %c0_24 = arith.constant 0 : index
    %c0_25 = arith.constant 0 : index
    %18 = vector.load %arg2[%c0_23, %c2, %c0_24, %c0_25] : memref<3x3x4x128xbf16, #tpu.memory_space<vmem>>, vector<1x1x4x128xbf16>
    %19 = vector.shape_cast %18 : vector<1x1x4x128xbf16> to vector<4x128xbf16>
    %cst_26 = arith.constant dense<0.000000e+00> : vector<64x128xf32>
    %20 = tpu.matmul %17, %19, %cst_26 {dimension_numbers = #tpu.dot_dimension_numbers<[1], [0], [0], [1], [0, 0, 1, 1], [], []>} : vector<64x4xbf16>, vector<4x128xbf16>, vector<64x128xf32> -> vector<64x128xf32>
    %21 = arith.addf %14, %20 : vector<64x128xf32>
    %c0_27 = arith.constant 0 : index
    %c2_28 = arith.constant 2 : index
    %c0_29 = arith.constant 0 : index
    %c0_30 = arith.constant 0 : index
    %c0_31 = arith.constant 0 : index
    %22 = vector.load %arg1[%c0_27, %c2_28, %c0_29, %c0_30, %c0_31] : memref<1x4x9x9x4xbf16, #tpu.memory_space<vmem>>, vector<1x1x8x8x4xbf16>
    %23 = vector.shape_cast %22 : vector<1x1x8x8x4xbf16> to vector<8x8x4xbf16>
    %24 = vector.shape_cast %23 : vector<8x8x4xbf16> to vector<64x4xbf16>
    %c1_32 = arith.constant 1 : index
    %c0_33 = arith.constant 0 : index
    %c0_34 = arith.constant 0 : index
    %c0_35 = arith.constant 0 : index
    %25 = vector.load %arg2[%c1_32, %c0_33, %c0_34, %c0_35] : memref<3x3x4x128xbf16, #tpu.memory_space<vmem>>, vector<1x1x4x128xbf16>
    %26 = vector.shape_cast %25 : vector<1x1x4x128xbf16> to vector<4x128xbf16>
    %cst_36 = arith.constant dense<0.000000e+00> : vector<64x128xf32>
    %27 = tpu.matmul %24, %26, %cst_36 {dimension_numbers = #tpu.dot_dimension_numbers<[1], [0], [0], [1], [0, 0, 1, 1], [], []>} : vector<64x4xbf16>, vector<4x128xbf16>, vector<64x128xf32> -> vector<64x128xf32>
    %28 = arith.addf %21, %27 : vector<64x128xf32>
    %c0_37 = arith.constant 0 : index
    %c3 = arith.constant 3 : index
    %c0_38 = arith.constant 0 : index
    %c0_39 = arith.constant 0 : index
    %c0_40 = arith.constant 0 : index
    %29 = vector.load %arg1[%c0_37, %c3, %c0_38, %c0_39, %c0_40] : memref<1x4x9x9x4xbf16, #tpu.memory_space<vmem>>, vector<1x1x8x8x4xbf16>
    %30 = vector.shape_cast %29 : vector<1x1x8x8x4xbf16> to vector<8x8x4xbf16>
    %31 = vector.shape_cast %30 : vector<8x8x4xbf16> to vector<64x4xbf16>
    %c1_41 = arith.constant 1 : index
    %c1_42 = arith.constant 1 : index
    %c0_43 = arith.constant 0 : index
    %c0_44 = arith.constant 0 : index
    %32 = vector.load %arg2[%c1_41, %c1_42, %c0_43, %c0_44] : memref<3x3x4x128xbf16, #tpu.memory_space<vmem>>, vector<1x1x4x128xbf16>
    %33 = vector.shape_cast %32 : vector<1x1x4x128xbf16> to vector<4x128xbf16>
    %cst_45 = arith.constant dense<0.000000e+00> : vector<64x128xf32>
    %34 = tpu.matmul %31, %33, %cst_45 {dimension_numbers = #tpu.dot_dimension_numbers<[1], [0], [0], [1], [0, 0, 1, 1], [], []>} : vector<64x4xbf16>, vector<4x128xbf16>, vector<64x128xf32> -> vector<64x128xf32>
    %35 = arith.addf %28, %34 : vector<64x128xf32>
    %c0_46 = arith.constant 0 : index
    %c2_47 = arith.constant 2 : index
    %c0_48 = arith.constant 0 : index
    %c1_49 = arith.constant 1 : index
    %c0_50 = arith.constant 0 : index
    %36 = vector.load %arg1[%c0_46, %c2_47, %c0_48, %c1_49, %c0_50] : memref<1x4x9x9x4xbf16, #tpu.memory_space<vmem>>, vector<1x1x8x8x4xbf16>
    %37 = vector.shape_cast %36 : vector<1x1x8x8x4xbf16> to vector<8x8x4xbf16>
    %38 = vector.shape_cast %37 : vector<8x8x4xbf16> to vector<64x4xbf16>
    %c1_51 = arith.constant 1 : index
    %c2_52 = arith.constant 2 : index
    %c0_53 = arith.constant 0 : index
    %c0_54 = arith.constant 0 : index
    %39 = vector.load %arg2[%c1_51, %c2_52, %c0_53, %c0_54] : memref<3x3x4x128xbf16, #tpu.memory_space<vmem>>, vector<1x1x4x128xbf16>
    %40 = vector.shape_cast %39 : vector<1x1x4x128xbf16> to vector<4x128xbf16>
    %cst_55 = arith.constant dense<0.000000e+00> : vector<64x128xf32>
    %41 = tpu.matmul %38, %40, %cst_55 {dimension_numbers = #tpu.dot_dimension_numbers<[1], [0], [0], [1], [0, 0, 1, 1], [], []>} : vector<64x4xbf16>, vector<4x128xbf16>, vector<64x128xf32> -> vector<64x128xf32>
    %42 = arith.addf %35, %41 : vector<64x128xf32>
    %c0_56 = arith.constant 0 : index
    %c0_57 = arith.constant 0 : index
    %c1_58 = arith.constant 1 : index
    %c0_59 = arith.constant 0 : index
    %c0_60 = arith.constant 0 : index
    %43 = vector.load %arg1[%c0_56, %c0_57, %c1_58, %c0_59, %c0_60] : memref<1x4x9x9x4xbf16, #tpu.memory_space<vmem>>, vector<1x1x8x8x4xbf16>
    %44 = vector.shape_cast %43 : vector<1x1x8x8x4xbf16> to vector<8x8x4xbf16>
    %45 = vector.shape_cast %44 : vector<8x8x4xbf16> to vector<64x4xbf16>
    %c2_61 = arith.constant 2 : index
    %c0_62 = arith.constant 0 : index
    %c0_63 = arith.constant 0 : index
    %c0_64 = arith.constant 0 : index
    %46 = vector.load %arg2[%c2_61, %c0_62, %c0_63, %c0_64] : memref<3x3x4x128xbf16, #tpu.memory_space<vmem>>, vector<1x1x4x128xbf16>
    %47 = vector.shape_cast %46 : vector<1x1x4x128xbf16> to vector<4x128xbf16>
    %cst_65 = arith.constant dense<0.000000e+00> : vector<64x128xf32>
    %48 = tpu.matmul %45, %47, %cst_65 {dimension_numbers = #tpu.dot_dimension_numbers<[1], [0], [0], [1], [0, 0, 1, 1], [], []>} : vector<64x4xbf16>, vector<4x128xbf16>, vector<64x128xf32> -> vector<64x128xf32>
    %49 = arith.addf %42, %48 : vector<64x128xf32>
    %c0_66 = arith.constant 0 : index
    %c1_67 = arith.constant 1 : index
    %c1_68 = arith.constant 1 : index
    %c0_69 = arith.constant 0 : index
    %c0_70 = arith.constant 0 : index
    %50 = vector.load %arg1[%c0_66, %c1_67, %c1_68, %c0_69, %c0_70] : memref<1x4x9x9x4xbf16, #tpu.memory_space<vmem>>, vector<1x1x8x8x4xbf16>
    %51 = vector.shape_cast %50 : vector<1x1x8x8x4xbf16> to vector<8x8x4xbf16>
    %52 = vector.shape_cast %51 : vector<8x8x4xbf16> to vector<64x4xbf16>
    %c2_71 = arith.constant 2 : index
    %c1_72 = arith.constant 1 : index
    %c0_73 = arith.constant 0 : index
    %c0_74 = arith.constant 0 : index
    %53 = vector.load %arg2[%c2_71, %c1_72, %c0_73, %c0_74] : memref<3x3x4x128xbf16, #tpu.memory_space<vmem>>, vector<1x1x4x128xbf16>
    %54 = vector.shape_cast %53 : vector<1x1x4x128xbf16> to vector<4x128xbf16>
    %cst_75 = arith.constant dense<0.000000e+00> : vector<64x128xf32>
    %55 = tpu.matmul %52, %54, %cst_75 {dimension_numbers = #tpu.dot_dimension_numbers<[1], [0], [0], [1], [0, 0, 1, 1], [], []>} : vector<64x4xbf16>, vector<4x128xbf16>, vector<64x128xf32> -> vector<64x128xf32>
    %56 = arith.addf %49, %55 : vector<64x128xf32>
    %c0_76 = arith.constant 0 : index
    %c0_77 = arith.constant 0 : index
    %c1_78 = arith.constant 1 : index
    %c1_79 = arith.constant 1 : index
    %c0_80 = arith.constant 0 : index
    %57 = vector.load %arg1[%c0_76, %c0_77, %c1_78, %c1_79, %c0_80] : memref<1x4x9x9x4xbf16, #tpu.memory_space<vmem>>, vector<1x1x8x8x4xbf16>
    %58 = vector.shape_cast %57 : vector<1x1x8x8x4xbf16> to vector<8x8x4xbf16>
    %59 = vector.shape_cast %58 : vector<8x8x4xbf16> to vector<64x4xbf16>
    %c2_81 = arith.constant 2 : index
    %c2_82 = arith.constant 2 : index
    %c0_83 = arith.constant 0 : index
    %c0_84 = arith.constant 0 : index
    %60 = vector.load %arg2[%c2_81, %c2_82, %c0_83, %c0_84] : memref<3x3x4x128xbf16, #tpu.memory_space<vmem>>, vector<1x1x4x128xbf16>
    %61 = vector.shape_cast %60 : vector<1x1x4x128xbf16> to vector<4x128xbf16>
    %cst_85 = arith.constant dense<0.000000e+00> : vector<64x128xf32>
    %62 = tpu.matmul %59, %61, %cst_85 {dimension_numbers = #tpu.dot_dimension_numbers<[1], [0], [0], [1], [0, 0, 1, 1], [], []>} : vector<64x4xbf16>, vector<4x128xbf16>, vector<64x128xf32> -> vector<64x128xf32>
    %63 = arith.addf %56, %62 : vector<64x128xf32>
    %c0_86 = arith.constant 0 : index
    %c0_87 = arith.constant 0 : index
    %64 = vector.load %arg3[%c0_86, %c0_87] : memref<1x128xf32, #tpu.memory_space<vmem>>, vector<1x128xf32>
    %65 = vector.broadcast %64 : vector<1x128xf32> to vector<64x128xf32>
    %66 = arith.addf %63, %65 : vector<64x128xf32>
    %67 = vector.shape_cast %66 : vector<64x128xf32> to vector<8x8x128xf32>
    %c0_88 = arith.constant 0 : index
    %c0_89 = arith.constant 0 : index
    %c0_90 = arith.constant 0 : index
    %c0_91 = arith.constant 0 : index
    %68 = vector.load %arg4[%c0_88, %c0_89, %c0_90, %c0_91] : memref<1x8x8x128xf32, #tpu.memory_space<vmem>>, vector<1x8x8x128xf32>
    %69 = vector.shape_cast %68 : vector<1x8x8x128xf32> to vector<8x8x128xf32>
    %70 = vector.shape_cast %67 : vector<8x8x128xf32> to vector<1x8x8x128xf32>
    tpu.vector_store %arg4[%c0_88, %c0_89, %c0_90, %c0_91], %70 {strides = array<i32>} : memref<1x8x8x128xf32, #tpu.memory_space<vmem>>, vector<1x8x8x128xf32>,
    return
  }
  func.func @transform_0(%arg0: i32) -> (i32, i32, i32, i32, i32) {
    %c0_i32 = arith.constant 0 : i32
    %c0_i32_0 = arith.constant 0 : i32
    %c0_i32_1 = arith.constant 0 : i32
    %c0_i32_2 = arith.constant 0 : i32
    %c0_i32_3 = arith.constant 0 : i32
    return %arg0, %c0_i32, %c0_i32_0, %c0_i32_1, %c0_i32_2 : i32, i32, i32, i32, i32
  }
  func.func @transform_1(%arg0: i32) -> (i32, i32, i32, i32) {
    %c0_i32 = arith.constant 0 : i32
    %c0_i32_0 = arith.constant 0 : i32
    %c0_i32_1 = arith.constant 0 : i32
    %c0_i32_2 = arith.constant 0 : i32
    %c0_i32_3 = arith.constant 0 : i32
    return %c0_i32, %c0_i32_0, %c0_i32_1, %c0_i32_2 : i32, i32, i32, i32
  }
  func.func @transform_2(%arg0: i32) -> (i32, i32) {
    %c0_i32 = arith.constant 0 : i32
    %c0_i32_0 = arith.constant 0 : i32
    %c0_i32_1 = arith.constant 0 : i32
    return %c0_i32, %c0_i32_0 : i32, i32
  }
  func.func @transform_3(%arg0: i32) -> (i32, i32, i32, i32) {
    %c0_i32 = arith.constant 0 : i32
    %c0_i32_0 = arith.constant 0 : i32
    %c0_i32_1 = arith.constant 0 : i32
    %c0_i32_2 = arith.constant 0 : i32
    return %arg0, %c0_i32, %c0_i32_0, %c0_i32_1 : i32, i32, i32, i32
  }
}

</mosaic_0001>

<llo_original>
// kernel: tpu_custom_call.1
$region0: #{tpu_custom_call.1}
  #allocation0 [shape = 'u32[]', space=smem, size = 0x4, offset = 0x4, fixed_abs, tag = 'smem constant byte address 0x4 - core index']
  #allocation1 [shape = 'u32[72,128]{1,0:T(1,128)}', space=vmem, size = 0x9000, scoped, tag = 'internal scratch']
  %s0 = inlined_call_operand.vmem [shape: bf16[2,4,9,9,4], index: 0, kind: input, shape index: {}]
  %s1 = inlined_call_operand.vmem [shape: bf16[3,3,4,128], index: 1, kind: input, shape index: {}]
  %s2 = inlined_call_operand.vmem [shape: f32[1,128], index: 2, kind: input, shape index: {}]
  %s3 = inlined_call_operand.hbm [shape: f32[2,8,8,128], index: 3, kind: output, shape index: {}]
  %s4 = sld [smem:[#allocation0]]
  $region45: #{tpu_custom_call.1} parent=0
    _
  %s6 = ssub.s32 1, %s4
  %s7 = scalar_select 0, %s6, %s4
  $region1: #{tpu_custom_call.1} parent=0
    #allocation2 [shape = 'u8[65536]{0}', space=vmem, size = 0x10000, scoped, tag = 'output window, operand 0']
    #allocation3 [shape = 's32[2]{0}', space=sflag, size = 0x8, scoped, tag = 'scoped memory for tpu_custom_call.1']
    %8 = vsyncpa [#allocation3], 0
    %s9 = scalar_lea.sflag [#allocation3], 1
    %10 = vsyncpa %s9, 0
    loop: start=0, step=1, limit=4
    $region2: #{tpu_custom_call.1} parent=1 // loop_pre_header
      _
    $region3: #{tpu_custom_call.1} parent=1 // loop_header
      %s12 = sphi 0, %s16
      %p13 = scmp.ge.s32.totalorder %s12, 4
      %s22 = sphi 0, %s24
      %s25 = sphi 0, %s22
      %s26 = sphi 0, %s25
      %s42 = sphi 0, %s26
      %s46 = sphi 0, %s46
      %s48 = sphi 0, %s46
      %s49 = sphi 0, %s48
      %s63 = sphi 0, %s49
      %s67 = sphi 0, %s67
      %s69 = sphi 0, %s67
      %s70 = sphi 0, %s69
      %s84 = sphi 0, %s70
      %s90 = sphi 0, %s92
      %s93 = sphi 0, %s90
      %s94 = sphi 0, %s93
      %s110 = sphi 0, %s94
    $region4: #{tpu_custom_call.1} parent=1 // loop_header_branch
      %15 = sbr.rel (%p13) target = $region8
    $region5: #{tpu_custom_call.1} parent=1 // loop_body
      %s17 = ssub.s32 %s12, 1
      %s18 = ssub.s32 %s12, 2
      %s19 = sadd.s32 %s12, 1
      %s20 = ssub.s32 %s12, %s19
      %p21 = scmp.eq.s32.totalorder %s20, 0
      %s23 = sadd.s32 %s22, 1
      %s24 = scalar_select %p21, %s22, %s23
      %p27 = pneg %p21
      %p28 = scmp.eq.s32.totalorder %s12, 1
      %p29 = por %p27, %p28
      %p30 = scmp.ne.s32.totalorder %s22, %s25
      %p31 = scmp.eq.s32.totalorder %s12, 0
      %p32 = por %p30, %p31
      %p33 = scmp.ne.s32.totalorder %s22, %s25
      %p34 = scmp.eq.s32.totalorder %s17, 1
      %p35 = por %p33, %p34
      %p36 = scmp.ne.s32.totalorder %s25, %s26
      %p37 = scmp.eq.s32.totalorder %s17, 0
      %p38 = por %p36, %p37
      %p39 = scmp.ne.s32.totalorder %s25, %s26
      %p40 = scmp.eq.s32.totalorder %s18, 1
      %p41 = por %p39, %p40
      %p43 = scmp.ne.s32.totalorder %s26, %s42
      %p44 = scmp.eq.s32.totalorder %s18, 0
      %p45 = por %p43, %p44
      %s47 = sadd.s32 %s46, 1
      %p50 = scmp.eq.s32.totalorder %s12, 1
      %p51 = scmp.ne.s32.totalorder %s46, %s48
      %p52 = scmp.eq.s32.totalorder %s12, 0
      %p53 = por %p51, %p52
      %p54 = scmp.ne.s32.totalorder %s46, %s48
      %p55 = scmp.eq.s32.totalorder %s17, 1
      %p56 = por %p54, %p55
      %p57 = scmp.ne.s32.totalorder %s48, %s49
      %p58 = scmp.eq.s32.totalorder %s17, 0
      %p59 = por %p57, %p58
      %p60 = scmp.ne.s32.totalorder %s48, %s49
      %p61 = scmp.eq.s32.totalorder %s18, 1
      %p62 = por %p60, %p61
      %p64 = scmp.ne.s32.totalorder %s49, %s63
      %p65 = scmp.eq.s32.totalorder %s18, 0
      %p66 = por %p64, %p65
      %s68 = sadd.s32 %s67, 1
      %p71 = scmp.eq.s32.totalorder %s12, 1
      %p72 = scmp.ne.s32.totalorder %s67, %s69
      %p73 = scmp.eq.s32.totalorder %s12, 0
      %p74 = por %p72, %p73
      %p75 = scmp.ne.s32.totalorder %s67, %s69
      %p76 = scmp.eq.s32.totalorder %s17, 1
      %p77 = por %p75, %p76
      %p78 = scmp.ne.s32.totalorder %s69, %s70
      %p79 = scmp.eq.s32.totalorder %s17, 0
      %p80 = por %p78, %p79
      %p81 = scmp.ne.s32.totalorder %s69, %s70
      %p82 = scmp.eq.s32.totalorder %s18, 1
      %p83 = por %p81, %p82
      %p85 = scmp.ne.s32.totalorder %s70, %s84
      %p86 = scmp.eq.s32.totalorder %s18, 0
      %p87 = por %p85, %p86
      %s88 = ssub.s32 %s12, %s19
      %p89 = scmp.eq.s32.totalorder %s88, 0
      %s91 = sadd.s32 %s90, 1
      %s92 = scalar_select %p89, %s90, %s91
      %p95 = pneg %p89
      %p96 = scmp.eq.s32.totalorder %s12, 1
      %p97 = por %p95, %p96
      %p98 = scmp.ne.s32.totalorder %s90, %s93
      %p99 = scmp.eq.s32.totalorder %s12, 0
      %p100 = por %p98, %p99
      %p101 = scmp.ne.s32.totalorder %s90, %s93
      %p102 = scmp.eq.s32.totalorder %s17, 1
      %p103 = por %p101, %p102
      %p104 = scmp.ne.s32.totalorder %s93, %s94
      %p105 = scmp.eq.s32.totalorder %s17, 0
      %p106 = por %p104, %p105
      %p107 = scmp.ne.s32.totalorder %s93, %s94
      %p108 = scmp.eq.s32.totalorder %s18, 1
      %p109 = por %p107, %p108
      %p111 = scmp.ne.s32.totalorder %s94, %s110
      %p112 = scmp.eq.s32.totalorder %s18, 0
      %p113 = por %p111, %p112
      %p114 = scmp.le.s32.totalorder 1, %s12
      %p115 = scmp.lt.s32.totalorder %s12, 3
      %p116 = pnand %p114, %p115
      %p117 = pneg %p116
      // Predicated region
      $region9: #{tpu_custom_call.1} parent=5 // pred_check
        _
      $region10: #{tpu_custom_call.1} parent=5 // pred_check_branch
        %119 = sbr.rel (%p116) target = $region12
      $region11: #{tpu_custom_call.1} parent=5 // pred_region
        %s120 = ssub.s32 %s12, 1
        // Predicated region
        $region13: #{tpu_custom_call.1} parent=11 // pred_check
          %p121 = pneg %p59
        $region14: #{tpu_custom_call.1} parent=11 // pred_check_branch
          %123 = sbr.rel (%p121) target = $region16
        $region15: #{tpu_custom_call.1} parent=11 // pred_region
          _
        $region16: #{tpu_custom_call.1} parent=11 // pred_fallthru
          _
        // Predicated region
        $region17: #{tpu_custom_call.1} parent=11 // pred_check
          %p124 = pneg %p80
        $region18: #{tpu_custom_call.1} parent=11 // pred_check_branch
          %126 = sbr.rel (%p124) target = $region20
        $region19: #{tpu_custom_call.1} parent=11 // pred_region
          _
        $region20: #{tpu_custom_call.1} parent=11 // pred_fallthru
          _
      $region12: #{tpu_custom_call.1} parent=5 // pred_fallthru
        _
      %p127 = scmp.lt.s32.totalorder %s12, 2
      // Predicated region
      $region21: #{tpu_custom_call.1} parent=5 // pred_check
        %p128 = pneg %p127
      $region22: #{tpu_custom_call.1} parent=5 // pred_check_branch
        %130 = sbr.rel (%p128) target = $region24
      $region23: #{tpu_custom_call.1} parent=5 // pred_region
        // Predicated region
        $region25: #{tpu_custom_call.1} parent=23 // pred_check
          %p131 = pneg %p32
        $region26: #{tpu_custom_call.1} parent=23 // pred_check_branch
          %133 = sbr.rel (%p131) target = $region28
        $region27: #{tpu_custom_call.1} parent=23 // pred_region
          %p134 = scmp.lt.s32.totalorder %s12, 1
          %s135 = scalar_select %p134, %s12, 1
          %s136 = smul.addr %s135, 72
          %s137 = smul.addr %s136, 4
          %s138 = scalar_lea.vmem %s0, %s137
        $region28: #{tpu_custom_call.1} parent=23 // pred_fallthru
          _
      $region24: #{tpu_custom_call.1} parent=5 // pred_fallthru
        _
      %p139 = scmp.le.s32.totalorder 1, %s12
      %p140 = scmp.lt.s32.totalorder %s12, 3
      %p141 = pnand %p139, %p140
      %p142 = pneg %p141
      // Predicated region
      $region29: #{tpu_custom_call.1} parent=5 // pred_check
        _
      $region30: #{tpu_custom_call.1} parent=5 // pred_check_branch
        %144 = sbr.rel (%p141) target = $region32
      $region31: #{tpu_custom_call.1} parent=5 // pred_region
        %s145 = ssub.s32 %s12, 1
        %p146 = scmp.lt.s32.totalorder %s17, 1
        %s147 = scalar_select %p146, %s17, 1
        %s148 = smul.addr %s147, 72
        %s149 = smul.addr %s148, 4
        %s150 = scalar_lea.vmem %s0, %s149
        %p151 = pneg %p38
        %p152 = pneg %p35
        %p153 = pneg %p59
        %p154 = pneg %p56
        %p155 = pneg %p80
        %p156 = pneg %p77
        %p157 = pneg %p106
        %p158 = pneg %p103
        %s159 = sand.u32 %s93, 1
        %s160 = scalar_lea.sflag [#allocation3], %s159
        %s161 = sand.u32 %s93, 1
        %s162 = smul.addr %s161, 64
        %s163 = scalar_lea.vmem [#allocation2], %s162
        %p164 = scmp.lt.s32.totalorder %s17, 1
        %s165 = scalar_select %p164, %s17, 1
        %s166 = smul.addr %s165, 72
        %s167 = smul.addr %s166, 4
        %s168 = scalar_lea.vmem %s0, %s167
        %v170 = vld [vmem:[%s168] sm:$0xf]
        %v171 = vld [vmem:[%s168 + $0x8] sm:$0xf]
        %v172 = vld [vmem:[%s168 + $0x10] sm:$0xf]
        %v173 = vld [vmem:[%s168 + $0x18] sm:$0xf]
        %v174 = vld [vmem:[%s168 + $0x20] sm:$0xf]
        %v175 = vld [vmem:[%s168 + $0x28] sm:$0xf]
        %v176 = vld [vmem:[%s168 + $0x30] sm:$0xf]
        %v177 = vld [vmem:[%s168 + $0x38] sm:$0xf]
        %v178 = vld [vmem:[%s1] sm:$0x3]
        %s179 = scalar_lea.vmem %s168, 72
        %v180 = vld [vmem:[%s179] sm:$0xf]
        %v181 = vld [vmem:[%s179 + $0x8] sm:$0xf]
        %v182 = vld [vmem:[%s179 + $0x10] sm:$0xf]
        %v183 = vld [vmem:[%s179 + $0x18] sm:$0xf]
        %v184 = vld [vmem:[%s179 + $0x20] sm:$0xf]
        %v185 = vld [vmem:[%s179 + $0x28] sm:$0xf]
        %v186 = vld [vmem:[%s179 + $0x30] sm:$0xf]
        %v187 = vld [vmem:[%s179 + $0x38] sm:$0xf]
        %s188 = scalar_lea.vmem %s1, 2
        %v189 = vld [vmem:[%s188] sm:$0x3]
        %v198 = vunpack.c.l.b16 %v180
        %v199 = vunpack.c.l.b16 %v181
        %v200 = vunpack.c.l.b16 %v182
        %v201 = vunpack.c.l.b16 %v183
        %v202 = vunpack.c.l.b16 %v184
        %v203 = vunpack.c.l.b16 %v185
        %v204 = vunpack.c.l.b16 %v186
        %v205 = vunpack.c.l.b16 %v187
        %v206 = vpack.c.b16 %v199, %v198
        %v207 = vpack.c.b16 %v201, %v200
        %v208 = vpack.c.b16 %v203, %v202
        %v209 = vpack.c.b16 %v205, %v204
        %vm210 = vcmask 31744
        %v212 = vsel %vm210, %v206, 0
        %v215 = vsel %vm210, %v207, 0
        %v218 = vsel %vm210, %v208, 0
        %v221 = vsel %vm210, %v209, 0
        %vm223 = vcmask 1041408
        %v225 = vsel %vm223, %v189, 0
        %227 = vmatpush.bf16.msra.mxu0 0
        %228 = vmatpush.bf16.msra.mxu0 0
        %229 = vmatpush.bf16.msra.mxu0 0
        %230 = vmatpush.bf16.msra.mxu0 0
        %231 = vmatpush.bf16.msra.mxu0 0
        %232 = vmatpush.bf16.msra.mxu0 0
        %233 = vmatpush.bf16.msra.mxu0 0
        %234 = vmatpush.bf16.msra.mxu0 %v225
        %235 = vmatmul.bf16.gmra.mxu0 %v212
        %v236 = vpop.f32.mrf.mxu0
        %v237 = vadd.f32 0.0, %v236
        %v238 = vpop.f32.mrf.mxu0
        %v239 = vadd.f32 0.0, %v238
        %240 = vmatmul.bf16.gmra.mxu0 %v215
        %v241 = vpop.f32.mrf.mxu0
        %v242 = vadd.f32 0.0, %v241
        %v243 = vpop.f32.mrf.mxu0
        %v244 = vadd.f32 0.0, %v243
        %245 = vmatmul.bf16.gmra.mxu0 %v218
        %v246 = vpop.f32.mrf.mxu0
        %v247 = vadd.f32 0.0, %v246
        %v248 = vpop.f32.mrf.mxu0
        %v249 = vadd.f32 0.0, %v248
        %250 = vmatmul.bf16.gmra.mxu0 %v221
        %v251 = vpop.f32.mrf.mxu0
        %v252 = vadd.f32 0.0, %v251
        %v253 = vpop.f32.mrf.mxu0
        %v254 = vadd.f32 0.0, %v253
        %255 = vdwg.mxu0
        %v264 = vunpack.c.l.b16 %v170
        %v265 = vunpack.c.l.b16 %v171
        %v266 = vunpack.c.l.b16 %v172
        %v267 = vunpack.c.l.b16 %v173
        %v268 = vunpack.c.l.b16 %v174
        %v269 = vunpack.c.l.b16 %v175
        %v270 = vunpack.c.l.b16 %v176
        %v271 = vunpack.c.l.b16 %v177
        %v272 = vpack.c.b16 %v265, %v264
        %v273 = vpack.c.b16 %v267, %v266
        %v274 = vpack.c.b16 %v269, %v268
        %v275 = vpack.c.b16 %v271, %v270
        %v277 = vsel %vm210, %v272, 0
        %v280 = vsel %vm210, %v273, 0
        %v283 = vsel %vm210, %v274, 0
        %v286 = vsel %vm210, %v275, 0
        %v289 = vsel %vm223, %v178, 0
        %291 = vmatpush.bf16.msra.mxu0 0
        %292 = vmatpush.bf16.msra.mxu0 0
        %293 = vmatpush.bf16.msra.mxu0 0
        %294 = vmatpush.bf16.msra.mxu0 0
        %295 = vmatpush.bf16.msra.mxu0 0
        %296 = vmatpush.bf16.msra.mxu0 0
        %297 = vmatpush.bf16.msra.mxu0 0
        %298 = vmatpush.bf16.msra.mxu0 %v289
        %299 = vmatmul.bf16.gmra.mxu0 %v277
        %v300 = vpop.f32.mrf.mxu0
        %v301 = vadd.f32 %v237, %v300
        %v302 = vpop.f32.mrf.mxu0
        %v303 = vadd.f32 %v239, %v302
        %304 = vmatmul.bf16.gmra.mxu0 %v280
        %v305 = vpop.f32.mrf.mxu0
        %v306 = vadd.f32 %v242, %v305
        %v307 = vpop.f32.mrf.mxu0
        %v308 = vadd.f32 %v244, %v307
        %309 = vmatmul.bf16.gmra.mxu0 %v283
        %v310 = vpop.f32.mrf.mxu0
        %v311 = vadd.f32 %v247, %v310
        %v312 = vpop.f32.mrf.mxu0
        %v313 = vadd.f32 %v249, %v312
        %314 = vmatmul.bf16.gmra.mxu0 %v286
        %v315 = vpop.f32.mrf.mxu0
        %v316 = vadd.f32 %v252, %v315
        %v317 = vpop.f32.mrf.mxu0
        %v318 = vadd.f32 %v254, %v317
        %319 = vdwg.mxu0
        %v320 = vld [vmem:[%s168] sm:$0xf]
        %v321 = vld [vmem:[%s168 + $0x4] sm:$0x1]
        %v322 = vld [vmem:[%s168 + $0x8] sm:$0xf]
        %v323 = vld [vmem:[%s168 + $0xc] sm:$0x1]
        %v324 = vld [vmem:[%s168 + $0x10] sm:$0xf]
        %v325 = vld [vmem:[%s168 + $0x14] sm:$0x1]
        %v326 = vld [vmem:[%s168 + $0x18] sm:$0xf]
        %v327 = vld [vmem:[%s168 + $0x1c] sm:$0x1]
        %v328 = vld [vmem:[%s168 + $0x20] sm:$0xf]
        %v329 = vld [vmem:[%s168 + $0x24] sm:$0x1]
        %v330 = vld [vmem:[%s168 + $0x28] sm:$0xf]
        %v331 = vld [vmem:[%s168 + $0x2c] sm:$0x1]
        %v332 = vld [vmem:[%s168 + $0x30] sm:$0xf]
        %v333 = vld [vmem:[%s168 + $0x34] sm:$0x1]
        %v334 = vld [vmem:[%s168 + $0x38] sm:$0xf]
        %v335 = vld [vmem:[%s168 + $0x3c] sm:$0x1]
        %vm336 = vsmask.f32 3328
        %vm337 = vsmask.f32 7440
        %vm338 = vmor %vm336, %vm337
        %v340 = vshrl.u32 %v320, 16
        %v342 = vrot.slane %v340, 4
        %v343 = vshll.u32 %v320, 16
        %v345 = vrot.slane %v343, 5
        %v346 = vor.u32 %v342, %v345
        %v347 = vrot.slane %v346, 4
        %v349 = vshll.u32 %v321, 16
        %v351 = vrot.slane %v349, 5
        %v352 = vsel %vm338, %v347, %v351
        %v354 = vshrl.u32 %v322, 16
        %v356 = vrot.slane %v354, 4
        %v357 = vshll.u32 %v322, 16
        %v359 = vrot.slane %v357, 5
        %v360 = vor.u32 %v356, %v359
        %v361 = vrot.slane %v360, 4
        %v363 = vshll.u32 %v323, 16
        %v365 = vrot.slane %v363, 5
        %v366 = vsel %vm338, %v361, %v365
        %v368 = vshrl.u32 %v324, 16
        %v370 = vrot.slane %v368, 4
        %v371 = vshll.u32 %v324, 16
        %v373 = vrot.slane %v371, 5
        %v374 = vor.u32 %v370, %v373
        %v375 = vrot.slane %v374, 4
        %v377 = vshll.u32 %v325, 16
        %v379 = vrot.slane %v377, 5
        %v380 = vsel %vm338, %v375, %v379
        %v382 = vshrl.u32 %v326, 16
        %v384 = vrot.slane %v382, 4
        %v385 = vshll.u32 %v326, 16
        %v387 = vrot.slane %v385, 5
        %v388 = vor.u32 %v384, %v387
        %v389 = vrot.slane %v388, 4
        %v391 = vshll.u32 %v327, 16
        %v393 = vrot.slane %v391, 5
        %v394 = vsel %vm338, %v389, %v393
        %v396 = vshrl.u32 %v328, 16
        %v398 = vrot.slane %v396, 4
        %v399 = vshll.u32 %v328, 16
        %v401 = vrot.slane %v399, 5
        %v402 = vor.u32 %v398, %v401
        %v403 = vrot.slane %v402, 4
        %v405 = vshll.u32 %v329, 16
        %v407 = vrot.slane %v405, 5
        %v408 = vsel %vm338, %v403, %v407
        %v410 = vshrl.u32 %v330, 16
        %v412 = vrot.slane %v410, 4
        %v413 = vshll.u32 %v330, 16
        %v415 = vrot.slane %v413, 5
        %v416 = vor.u32 %v412, %v415
        %v417 = vrot.slane %v416, 4
        %v419 = vshll.u32 %v331, 16
        %v421 = vrot.slane %v419, 5
        %v422 = vsel %vm338, %v417, %v421
        %v424 = vshrl.u32 %v332, 16
        %v426 = vrot.slane %v424, 4
        %v427 = vshll.u32 %v332, 16
        %v429 = vrot.slane %v427, 5
        %v430 = vor.u32 %v426, %v429
        %v431 = vrot.slane %v430, 4
        %v433 = vshll.u32 %v333, 16
        %v435 = vrot.slane %v433, 5
        %v436 = vsel %vm338, %v431, %v435
        %v438 = vshrl.u32 %v334, 16
        %v440 = vrot.slane %v438, 4
        %v441 = vshll.u32 %v334, 16
        %v443 = vrot.slane %v441, 5
        %v444 = vor.u32 %v440, %v443
        %v445 = vrot.slane %v444, 4
        %v447 = vshll.u32 %v335, 16
        %v449 = vrot.slane %v447, 5
        %v450 = vsel %vm338, %v445, %v449
        %s451 = scalar_lea.vmem %s1, 4
        %v452 = vld [vmem:[%s451] sm:$0x3]
        %v453 = vunpack.c.l.b16 %v352
        %v454 = vunpack.c.l.b16 %v366
        %v455 = vunpack.c.l.b16 %v380
        %v456 = vunpack.c.l.b16 %v394
        %v457 = vunpack.c.l.b16 %v408
        %v458 = vunpack.c.l.b16 %v422
        %v459 = vunpack.c.l.b16 %v436
        %v460 = vunpack.c.l.b16 %v450
        %v461 = vpack.c.b16 %v454, %v453
        %v462 = vpack.c.b16 %v456, %v455
        %v463 = vpack.c.b16 %v458, %v457
        %v464 = vpack.c.b16 %v460, %v459
        %v466 = vsel %vm210, %v461, 0
        %v469 = vsel %vm210, %v462, 0
        %v472 = vsel %vm210, %v463, 0
        %v475 = vsel %vm210, %v464, 0
        %v478 = vsel %vm223, %v452, 0
        %480 = vmatpush.bf16.msra.mxu0 0
        %481 = vmatpush.bf16.msra.mxu0 0
        %482 = vmatpush.bf16.msra.mxu0 0
        %483 = vmatpush.bf16.msra.mxu0 0
        %484 = vmatpush.bf16.msra.mxu0 0
        %485 = vmatpush.bf16.msra.mxu0 0
        %486 = vmatpush.bf16.msra.mxu0 0
        %487 = vmatpush.bf16.msra.mxu0 %v478
        %488 = vmatmul.bf16.gmra.mxu0 %v466
        %v489 = vpop.f32.mrf.mxu0
        %v490 = vadd.f32 0.0, %v489
        %v491 = vpop.f32.mrf.mxu0
        %v492 = vadd.f32 0.0, %v491
        %493 = vmatmul.bf16.gmra.mxu0 %v469
        %v494 = vpop.f32.mrf.mxu0
        %v495 = vadd.f32 0.0, %v494
        %v496 = vpop.f32.mrf.mxu0
        %v497 = vadd.f32 0.0, %v496
        %498 = vmatmul.bf16.gmra.mxu0 %v472
        %v499 = vpop.f32.mrf.mxu0
        %v500 = vadd.f32 0.0, %v499
        %v501 = vpop.f32.mrf.mxu0
        %v502 = vadd.f32 0.0, %v501
        %503 = vmatmul.bf16.gmra.mxu0 %v475
        %v504 = vpop.f32.mrf.mxu0
        %v505 = vadd.f32 0.0, %v504
        %v506 = vpop.f32.mrf.mxu0
        %v507 = vadd.f32 0.0, %v506
        %508 = vdwg.mxu0
        %v509 = vadd.f32 %v301, %v490
        %v510 = vadd.f32 %v303, %v492
        %v511 = vadd.f32 %v306, %v495
        %v512 = vadd.f32 %v308, %v497
        %v513 = vadd.f32 %v311, %v500
        %v514 = vadd.f32 %v313, %v502
        %v515 = vadd.f32 %v316, %v505
        %v516 = vadd.f32 %v318, %v507
        %s517 = scalar_lea.vmem %s168, 144
        %v518 = vld [vmem:[%s517] sm:$0xf]
        %v519 = vld [vmem:[%s517 + $0x8] sm:$0xf]
        %v520 = vld [vmem:[%s517 + $0x10] sm:$0xf]
        %v521 = vld [vmem:[%s517 + $0x18] sm:$0xf]
        %v522 = vld [vmem:[%s517 + $0x20] sm:$0xf]
        %v523 = vld [vmem:[%s517 + $0x28] sm:$0xf]
        %v524 = vld [vmem:[%s517 + $0x30] sm:$0xf]
        %v525 = vld [vmem:[%s517 + $0x38] sm:$0xf]
        %s526 = scalar_lea.vmem %s1, 6
        %v527 = vld [vmem:[%s526] sm:$0x3]
        %v536 = vunpack.c.l.b16 %v518
        %v537 = vunpack.c.l.b16 %v519
        %v538 = vunpack.c.l.b16 %v520
        %v539 = vunpack.c.l.b16 %v521
        %v540 = vunpack.c.l.b16 %v522
        %v541 = vunpack.c.l.b16 %v523
        %v542 = vunpack.c.l.b16 %v524
        %v543 = vunpack.c.l.b16 %v525
        %v544 = vpack.c.b16 %v537, %v536
        %v545 = vpack.c.b16 %v539, %v538
        %v546 = vpack.c.b16 %v541, %v540
        %v547 = vpack.c.b16 %v543, %v542
        %v549 = vsel %vm210, %v544, 0
        %v552 = vsel %vm210, %v545, 0
        %v555 = vsel %vm210, %v546, 0
        %v558 = vsel %vm210, %v547, 0
        %v561 = vsel %vm223, %v527, 0
        %563 = vmatpush.bf16.msra.mxu0 0
        %564 = vmatpush.bf16.msra.mxu0 0
        %565 = vmatpush.bf16.msra.mxu0 0
        %566 = vmatpush.bf16.msra.mxu0 0
        %567 = vmatpush.bf16.msra.mxu0 0
        %568 = vmatpush.bf16.msra.mxu0 0
        %569 = vmatpush.bf16.msra.mxu0 0
        %570 = vmatpush.bf16.msra.mxu0 %v561
        %571 = vmatmul.bf16.gmra.mxu0 %v549
        %v572 = vpop.f32.mrf.mxu0
        %v573 = vadd.f32 0.0, %v572
        %v574 = vpop.f32.mrf.mxu0
        %v575 = vadd.f32 0.0, %v574
        %576 = vmatmul.bf16.gmra.mxu0 %v552
        %v577 = vpop.f32.mrf.mxu0
        %v578 = vadd.f32 0.0, %v577
        %v579 = vpop.f32.mrf.mxu0
        %v580 = vadd.f32 0.0, %v579
        %581 = vmatmul.bf16.gmra.mxu0 %v555
        %v582 = vpop.f32.mrf.mxu0
        %v583 = vadd.f32 0.0, %v582
        %v584 = vpop.f32.mrf.mxu0
        %v585 = vadd.f32 0.0, %v584
        %586 = vmatmul.bf16.gmra.mxu0 %v558
        %v587 = vpop.f32.mrf.mxu0
        %v588 = vadd.f32 0.0, %v587
        %v589 = vpop.f32.mrf.mxu0
        %v590 = vadd.f32 0.0, %v589
        %591 = vdwg.mxu0
        %v592 = vadd.f32 %v509, %v573
        %v593 = vadd.f32 %v510, %v575
        %v594 = vadd.f32 %v511, %v578
        %v595 = vadd.f32 %v512, %v580
        %v596 = vadd.f32 %v513, %v583
        %v597 = vadd.f32 %v514, %v585
        %v598 = vadd.f32 %v515, %v588
        %v599 = vadd.f32 %v516, %v590
        %s600 = scalar_lea.vmem %s168, 216
        %v601 = vld [vmem:[%s600] sm:$0xf]
        %v602 = vld [vmem:[%s600 + $0x8] sm:$0xf]
        %v603 = vld [vmem:[%s600 + $0x10] sm:$0xf]
        %v604 = vld [vmem:[%s600 + $0x18] sm:$0xf]
        %v605 = vld [vmem:[%s600 + $0x20] sm:$0xf]
        %v606 = vld [vmem:[%s600 + $0x28] sm:$0xf]
        %v607 = vld [vmem:[%s600 + $0x30] sm:$0xf]
        %v608 = vld [vmem:[%s600 + $0x38] sm:$0xf]
        %s609 = scalar_lea.vmem %s1, 8
        %v610 = vld [vmem:[%s609] sm:$0x3]
        %v619 = vunpack.c.l.b16 %v601
        %v620 = vunpack.c.l.b16 %v602
        %v621 = vunpack.c.l.b16 %v603
        %v622 = vunpack.c.l.b16 %v604
        %v623 = vunpack.c.l.b16 %v605
        %v624 = vunpack.c.l.b16 %v606
        %v625 = vunpack.c.l.b16 %v607
        %v626 = vunpack.c.l.b16 %v608
        %v627 = vpack.c.b16 %v620, %v619
        %v628 = vpack.c.b16 %v622, %v621
        %v629 = vpack.c.b16 %v624, %v623
        %v630 = vpack.c.b16 %v626, %v625
        %v632 = vsel %vm210, %v627, 0
        %v635 = vsel %vm210, %v628, 0
        %v638 = vsel %vm210, %v629, 0
        %v641 = vsel %vm210, %v630, 0
        %v644 = vsel %vm223, %v610, 0
        %646 = vmatpush.bf16.msra.mxu0 0
        %647 = vmatpush.bf16.msra.mxu0 0
        %648 = vmatpush.bf16.msra.mxu0 0
        %649 = vmatpush.bf16.msra.mxu0 0
        %650 = vmatpush.bf16.msra.mxu0 0
        %651 = vmatpush.bf16.msra.mxu0 0
        %652 = vmatpush.bf16.msra.mxu0 0
        %653 = vmatpush.bf16.msra.mxu0 %v644
        %654 = vmatmul.bf16.gmra.mxu0 %v632
        %v655 = vpop.f32.mrf.mxu0
        %v656 = vadd.f32 0.0, %v655
        %v657 = vpop.f32.mrf.mxu0
        %v658 = vadd.f32 0.0, %v657
        %659 = vmatmul.bf16.gmra.mxu0 %v635
        %v660 = vpop.f32.mrf.mxu0
        %v661 = vadd.f32 0.0, %v660
        %v662 = vpop.f32.mrf.mxu0
        %v663 = vadd.f32 0.0, %v662
        %664 = vmatmul.bf16.gmra.mxu0 %v638
        %v665 = vpop.f32.mrf.mxu0
        %v666 = vadd.f32 0.0, %v665
        %v667 = vpop.f32.mrf.mxu0
        %v668 = vadd.f32 0.0, %v667
        %669 = vmatmul.bf16.gmra.mxu0 %v641
        %v670 = vpop.f32.mrf.mxu0
        %v671 = vadd.f32 0.0, %v670
        %v672 = vpop.f32.mrf.mxu0
        %v673 = vadd.f32 0.0, %v672
        %674 = vdwg.mxu0
        %v675 = vadd.f32 %v592, %v656
        %v676 = vadd.f32 %v593, %v658
        %v677 = vadd.f32 %v594, %v661
        %v678 = vadd.f32 %v595, %v663
        %v679 = vadd.f32 %v596, %v666
        %v680 = vadd.f32 %v597, %v668
        %v681 = vadd.f32 %v598, %v671
        %v682 = vadd.f32 %v599, %v673
        %v683 = vld [vmem:[%s517] sm:$0xf]
        %v684 = vld [vmem:[%s517 + $0x4] sm:$0x1]
        %v685 = vld [vmem:[%s517 + $0x8] sm:$0xf]
        %v686 = vld [vmem:[%s517 + $0xc] sm:$0x1]
        %v687 = vld [vmem:[%s517 + $0x10] sm:$0xf]
        %v688 = vld [vmem:[%s517 + $0x14] sm:$0x1]
        %v689 = vld [vmem:[%s517 + $0x18] sm:$0xf]
        %v690 = vld [vmem:[%s517 + $0x1c] sm:$0x1]
        %v691 = vld [vmem:[%s517 + $0x20] sm:$0xf]
        %v692 = vld [vmem:[%s517 + $0x24] sm:$0x1]
        %v693 = vld [vmem:[%s517 + $0x28] sm:$0xf]
        %v694 = vld [vmem:[%s517 + $0x2c] sm:$0x1]
        %v695 = vld [vmem:[%s517 + $0x30] sm:$0xf]
        %v696 = vld [vmem:[%s517 + $0x34] sm:$0x1]
        %v697 = vld [vmem:[%s517 + $0x38] sm:$0xf]
        %v698 = vld [vmem:[%s517 + $0x3c] sm:$0x1]
        %v700 = vshrl.u32 %v683, 16
        %v702 = vrot.slane %v700, 4
        %v703 = vshll.u32 %v683, 16
        %v705 = vrot.slane %v703, 5
        %v706 = vor.u32 %v702, %v705
        %v707 = vrot.slane %v706, 4
        %v709 = vshll.u32 %v684, 16
        %v711 = vrot.slane %v709, 5
        %v712 = vsel %vm338, %v707, %v711
        %v714 = vshrl.u32 %v685, 16
        %v716 = vrot.slane %v714, 4
        %v717 = vshll.u32 %v685, 16
        %v719 = vrot.slane %v717, 5
        %v720 = vor.u32 %v716, %v719
        %v721 = vrot.slane %v720, 4
        %v723 = vshll.u32 %v686, 16
        %v725 = vrot.slane %v723, 5
        %v726 = vsel %vm338, %v721, %v725
        %v728 = vshrl.u32 %v687, 16
        %v730 = vrot.slane %v728, 4
        %v731 = vshll.u32 %v687, 16
        %v733 = vrot.slane %v731, 5
        %v734 = vor.u32 %v730, %v733
        %v735 = vrot.slane %v734, 4
        %v737 = vshll.u32 %v688, 16
        %v739 = vrot.slane %v737, 5
        %v740 = vsel %vm338, %v735, %v739
        %v742 = vshrl.u32 %v689, 16
        %v744 = vrot.slane %v742, 4
        %v745 = vshll.u32 %v689, 16
        %v747 = vrot.slane %v745, 5
        %v748 = vor.u32 %v744, %v747
        %v749 = vrot.slane %v748, 4
        %v751 = vshll.u32 %v690, 16
        %v753 = vrot.slane %v751, 5
        %v754 = vsel %vm338, %v749, %v753
        %v756 = vshrl.u32 %v691, 16
        %v758 = vrot.slane %v756, 4
        %v759 = vshll.u32 %v691, 16
        %v761 = vrot.slane %v759, 5
        %v762 = vor.u32 %v758, %v761
        %v763 = vrot.slane %v762, 4
        %v765 = vshll.u32 %v692, 16
        %v767 = vrot.slane %v765, 5
        %v768 = vsel %vm338, %v763, %v767
        %v770 = vshrl.u32 %v693, 16
        %v772 = vrot.slane %v770, 4
        %v773 = vshll.u32 %v693, 16
        %v775 = vrot.slane %v773, 5
        %v776 = vor.u32 %v772, %v775
        %v777 = vrot.slane %v776, 4
        %v779 = vshll.u32 %v694, 16
        %v781 = vrot.slane %v779, 5
        %v782 = vsel %vm338, %v777, %v781
        %v784 = vshrl.u32 %v695, 16
        %v786 = vrot.slane %v784, 4
        %v787 = vshll.u32 %v695, 16
        %v789 = vrot.slane %v787, 5
        %v790 = vor.u32 %v786, %v789
        %v791 = vrot.slane %v790, 4
        %v793 = vshll.u32 %v696, 16
        %v795 = vrot.slane %v793, 5
        %v796 = vsel %vm338, %v791, %v795
        %v798 = vshrl.u32 %v697, 16
        %v800 = vrot.slane %v798, 4
        %v801 = vshll.u32 %v697, 16
        %v803 = vrot.slane %v801, 5
        %v804 = vor.u32 %v800, %v803
        %v805 = vrot.slane %v804, 4
        %v807 = vshll.u32 %v698, 16
        %v809 = vrot.slane %v807, 5
        %v810 = vsel %vm338, %v805, %v809
        %s811 = scalar_lea.vmem %s1, 10
        %v812 = vld [vmem:[%s811] sm:$0x3]
        %v813 = vunpack.c.l.b16 %v712
        %v814 = vunpack.c.l.b16 %v726
        %v815 = vunpack.c.l.b16 %v740
        %v816 = vunpack.c.l.b16 %v754
        %v817 = vunpack.c.l.b16 %v768
        %v818 = vunpack.c.l.b16 %v782
        %v819 = vunpack.c.l.b16 %v796
        %v820 = vunpack.c.l.b16 %v810
        %v821 = vpack.c.b16 %v814, %v813
        %v822 = vpack.c.b16 %v816, %v815
        %v823 = vpack.c.b16 %v818, %v817
        %v824 = vpack.c.b16 %v820, %v819
        %v826 = vsel %vm210, %v821, 0
        %v829 = vsel %vm210, %v822, 0
        %v832 = vsel %vm210, %v823, 0
        %v835 = vsel %vm210, %v824, 0
        %v838 = vsel %vm223, %v812, 0
        %840 = vmatpush.bf16.msra.mxu0 0
        %841 = vmatpush.bf16.msra.mxu0 0
        %842 = vmatpush.bf16.msra.mxu0 0
        %843 = vmatpush.bf16.msra.mxu0 0
        %844 = vmatpush.bf16.msra.mxu0 0
        %845 = vmatpush.bf16.msra.mxu0 0
        %846 = vmatpush.bf16.msra.mxu0 0
        %847 = vmatpush.bf16.msra.mxu0 %v838
        %848 = vmatmul.bf16.gmra.mxu0 %v826
        %v849 = vpop.f32.mrf.mxu0
        %v850 = vadd.f32 0.0, %v849
        %v851 = vpop.f32.mrf.mxu0
        %v852 = vadd.f32 0.0, %v851
        %853 = vmatmul.bf16.gmra.mxu0 %v829
        %v854 = vpop.f32.mrf.mxu0
        %v855 = vadd.f32 0.0, %v854
        %v856 = vpop.f32.mrf.mxu0
        %v857 = vadd.f32 0.0, %v856
        %858 = vmatmul.bf16.gmra.mxu0 %v832
        %v859 = vpop.f32.mrf.mxu0
        %v860 = vadd.f32 0.0, %v859
        %v861 = vpop.f32.mrf.mxu0
        %v862 = vadd.f32 0.0, %v861
        %863 = vmatmul.bf16.gmra.mxu0 %v835
        %v864 = vpop.f32.mrf.mxu0
        %v865 = vadd.f32 0.0, %v864
        %v866 = vpop.f32.mrf.mxu0
        %v867 = vadd.f32 0.0, %v866
        %868 = vdwg.mxu0
        %v869 = vadd.f32 %v675, %v850
        %v870 = vadd.f32 %v676, %v852
        %v871 = vadd.f32 %v677, %v855
        %v872 = vadd.f32 %v678, %v857
        %v873 = vadd.f32 %v679, %v860
        %v874 = vadd.f32 %v680, %v862
        %v875 = vadd.f32 %v681, %v865
        %v876 = vadd.f32 %v682, %v867
        %s877 = scalar_lea.vmem %s168, 8
        %v878 = vld [vmem:[%s877] sm:$0xf]
        %v879 = vld [vmem:[%s877 + $0x8] sm:$0xf]
        %v880 = vld [vmem:[%s877 + $0x10] sm:$0xf]
        %v881 = vld [vmem:[%s877 + $0x18] sm:$0xf]
        %v882 = vld [vmem:[%s877 + $0x20] sm:$0xf]
        %v883 = vld [vmem:[%s877 + $0x28] sm:$0xf]
        %v884 = vld [vmem:[%s877 + $0x30] sm:$0xf]
        %v885 = vld [vmem:[%s877 + $0x38] sm:$0xf]
        %s886 = scalar_lea.vmem %s1, 12
        %v887 = vld [vmem:[%s886] sm:$0x3]
        %v896 = vunpack.c.l.b16 %v878
        %v897 = vunpack.c.l.b16 %v879
        %v898 = vunpack.c.l.b16 %v880
        %v899 = vunpack.c.l.b16 %v881
        %v900 = vunpack.c.l.b16 %v882
        %v901 = vunpack.c.l.b16 %v883
        %v902 = vunpack.c.l.b16 %v884
        %v903 = vunpack.c.l.b16 %v885
        %v904 = vpack.c.b16 %v897, %v896
        %v905 = vpack.c.b16 %v899, %v898
        %v906 = vpack.c.b16 %v901, %v900
        %v907 = vpack.c.b16 %v903, %v902
        %v909 = vsel %vm210, %v904, 0
        %v912 = vsel %vm210, %v905, 0
        %v915 = vsel %vm210, %v906, 0
        %v918 = vsel %vm210, %v907, 0
        %v921 = vsel %vm223, %v887, 0
        %923 = vmatpush.bf16.msra.mxu0 0
        %924 = vmatpush.bf16.msra.mxu0 0
        %925 = vmatpush.bf16.msra.mxu0 0
        %926 = vmatpush.bf16.msra.mxu0 0
        %927 = vmatpush.bf16.msra.mxu0 0
        %928 = vmatpush.bf16.msra.mxu0 0
        %929 = vmatpush.bf16.msra.mxu0 0
        %930 = vmatpush.bf16.msra.mxu0 %v921
        %931 = vmatmul.bf16.gmra.mxu0 %v909
        %v932 = vpop.f32.mrf.mxu0
        %v933 = vadd.f32 0.0, %v932
        %v934 = vpop.f32.mrf.mxu0
        %v935 = vadd.f32 0.0, %v934
        %936 = vmatmul.bf16.gmra.mxu0 %v912
        %v937 = vpop.f32.mrf.mxu0
        %v938 = vadd.f32 0.0, %v937
        %v939 = vpop.f32.mrf.mxu0
        %v940 = vadd.f32 0.0, %v939
        %941 = vmatmul.bf16.gmra.mxu0 %v915
        %v942 = vpop.f32.mrf.mxu0
        %v943 = vadd.f32 0.0, %v942
        %v944 = vpop.f32.mrf.mxu0
        %v945 = vadd.f32 0.0, %v944
        %946 = vmatmul.bf16.gmra.mxu0 %v918
        %v947 = vpop.f32.mrf.mxu0
        %v948 = vadd.f32 0.0, %v947
        %v949 = vpop.f32.mrf.mxu0
        %v950 = vadd.f32 0.0, %v949
        %951 = vdwg.mxu0
        %v952 = vadd.f32 %v869, %v933
        %v953 = vadd.f32 %v870, %v935
        %v954 = vadd.f32 %v871, %v938
        %v955 = vadd.f32 %v872, %v940
        %v956 = vadd.f32 %v873, %v943
        %v957 = vadd.f32 %v874, %v945
        %v958 = vadd.f32 %v875, %v948
        %v959 = vadd.f32 %v876, %v950
        %s960 = scalar_lea.vmem %s168, 80
        %v961 = vld [vmem:[%s960] sm:$0xf]
        %v962 = vld [vmem:[%s960 + $0x8] sm:$0xf]
        %v963 = vld [vmem:[%s960 + $0x10] sm:$0xf]
        %v964 = vld [vmem:[%s960 + $0x18] sm:$0xf]
        %v965 = vld [vmem:[%s960 + $0x20] sm:$0xf]
        %v966 = vld [vmem:[%s960 + $0x28] sm:$0xf]
        %v967 = vld [vmem:[%s960 + $0x30] sm:$0xf]
        %v968 = vld [vmem:[%s960 + $0x38] sm:$0xf]
        %s969 = scalar_lea.vmem %s1, 14
        %v970 = vld [vmem:[%s969] sm:$0x3]
        %v979 = vunpack.c.l.b16 %v961
        %v980 = vunpack.c.l.b16 %v962
        %v981 = vunpack.c.l.b16 %v963
        %v982 = vunpack.c.l.b16 %v964
        %v983 = vunpack.c.l.b16 %v965
        %v984 = vunpack.c.l.b16 %v966
        %v985 = vunpack.c.l.b16 %v967
        %v986 = vunpack.c.l.b16 %v968
        %v987 = vpack.c.b16 %v980, %v979
        %v988 = vpack.c.b16 %v982, %v981
        %v989 = vpack.c.b16 %v984, %v983
        %v990 = vpack.c.b16 %v986, %v985
        %v992 = vsel %vm210, %v987, 0
        %v995 = vsel %vm210, %v988, 0
        %v998 = vsel %vm210, %v989, 0
        %v1001 = vsel %vm210, %v990, 0
        %v1004 = vsel %vm223, %v970, 0
        %1006 = vmatpush.bf16.msra.mxu0 0
        %1007 = vmatpush.bf16.msra.mxu0 0
        %1008 = vmatpush.bf16.msra.mxu0 0
        %1009 = vmatpush.bf16.msra.mxu0 0
        %1010 = vmatpush.bf16.msra.mxu0 0
        %1011 = vmatpush.bf16.msra.mxu0 0
        %1012 = vmatpush.bf16.msra.mxu0 0
        %1013 = vmatpush.bf16.msra.mxu0 %v1004
        %1014 = vmatmul.bf16.gmra.mxu0 %v992
        %v1015 = vpop.f32.mrf.mxu0
        %v1016 = vadd.f32 0.0, %v1015
        %v1017 = vpop.f32.mrf.mxu0
        %v1018 = vadd.f32 0.0, %v1017
        %1019 = vmatmul.bf16.gmra.mxu0 %v995
        %v1020 = vpop.f32.mrf.mxu0
        %v1021 = vadd.f32 0.0, %v1020
        %v1022 = vpop.f32.mrf.mxu0
        %v1023 = vadd.f32 0.0, %v1022
        %1024 = vmatmul.bf16.gmra.mxu0 %v998
        %v1025 = vpop.f32.mrf.mxu0
        %v1026 = vadd.f32 0.0, %v1025
        %v1027 = vpop.f32.mrf.mxu0
        %v1028 = vadd.f32 0.0, %v1027
        %1029 = vmatmul.bf16.gmra.mxu0 %v1001
        %v1030 = vpop.f32.mrf.mxu0
        %v1031 = vadd.f32 0.0, %v1030
        %v1032 = vpop.f32.mrf.mxu0
        %v1033 = vadd.f32 0.0, %v1032
        %1034 = vdwg.mxu0
        %v1035 = vadd.f32 %v952, %v1016
        %v1036 = vadd.f32 %v953, %v1018
        %v1037 = vadd.f32 %v954, %v1021
        %v1038 = vadd.f32 %v955, %v1023
        %v1039 = vadd.f32 %v956, %v1026
        %v1040 = vadd.f32 %v957, %v1028
        %v1041 = vadd.f32 %v958, %v1031
        %v1042 = vadd.f32 %v959, %v1033
        %v1043 = vld [vmem:[%s877] sm:$0xf]
        %v1044 = vld [vmem:[%s877 + $0x4] sm:$0x1]
        %v1045 = vld [vmem:[%s877 + $0x8] sm:$0xf]
        %v1046 = vld [vmem:[%s877 + $0xc] sm:$0x1]
        %v1047 = vld [vmem:[%s877 + $0x10] sm:$0xf]
        %v1048 = vld [vmem:[%s877 + $0x14] sm:$0x1]
        %v1049 = vld [vmem:[%s877 + $0x18] sm:$0xf]
        %v1050 = vld [vmem:[%s877 + $0x1c] sm:$0x1]
        %v1051 = vld [vmem:[%s877 + $0x20] sm:$0xf]
        %v1052 = vld [vmem:[%s877 + $0x24] sm:$0x1]
        %v1053 = vld [vmem:[%s877 + $0x28] sm:$0xf]
        %v1054 = vld [vmem:[%s877 + $0x2c] sm:$0x1]
        %v1055 = vld [vmem:[%s877 + $0x30] sm:$0xf]
        %v1056 = vld [vmem:[%s877 + $0x34] sm:$0x1]
        %v1057 = vld [vmem:[%s877 + $0x38] sm:$0xf]
        %v1058 = vld [vmem:[%s877 + $0x3c] sm:$0x1]
        %v1060 = vshrl.u32 %v1043, 16
        %v1062 = vrot.slane %v1060, 4
        %v1063 = vshll.u32 %v1043, 16
        %v1065 = vrot.slane %v1063, 5
        %v1066 = vor.u32 %v1062, %v1065
        %v1067 = vrot.slane %v1066, 4
        %v1069 = vshll.u32 %v1044, 16
        %v1071 = vrot.slane %v1069, 5
        %v1072 = vsel %vm338, %v1067, %v1071
        %v1074 = vshrl.u32 %v1045, 16
        %v1076 = vrot.slane %v1074, 4
        %v1077 = vshll.u32 %v1045, 16
        %v1079 = vrot.slane %v1077, 5
        %v1080 = vor.u32 %v1076, %v1079
        %v1081 = vrot.slane %v1080, 4
        %v1083 = vshll.u32 %v1046, 16
        %v1085 = vrot.slane %v1083, 5
        %v1086 = vsel %vm338, %v1081, %v1085
        %v1088 = vshrl.u32 %v1047, 16
        %v1090 = vrot.slane %v1088, 4
        %v1091 = vshll.u32 %v1047, 16
        %v1093 = vrot.slane %v1091, 5
        %v1094 = vor.u32 %v1090, %v1093
        %v1095 = vrot.slane %v1094, 4
        %v1097 = vshll.u32 %v1048, 16
        %v1099 = vrot.slane %v1097, 5
        %v1100 = vsel %vm338, %v1095, %v1099
        %v1102 = vshrl.u32 %v1049, 16
        %v1104 = vrot.slane %v1102, 4
        %v1105 = vshll.u32 %v1049, 16
        %v1107 = vrot.slane %v1105, 5
        %v1108 = vor.u32 %v1104, %v1107
        %v1109 = vrot.slane %v1108, 4
        %v1111 = vshll.u32 %v1050, 16
        %v1113 = vrot.slane %v1111, 5
        %v1114 = vsel %vm338, %v1109, %v1113
        %v1116 = vshrl.u32 %v1051, 16
        %v1118 = vrot.slane %v1116, 4
        %v1119 = vshll.u32 %v1051, 16
        %v1121 = vrot.slane %v1119, 5
        %v1122 = vor.u32 %v1118, %v1121
        %v1123 = vrot.slane %v1122, 4
        %v1125 = vshll.u32 %v1052, 16
        %v1127 = vrot.slane %v1125, 5
        %v1128 = vsel %vm338, %v1123, %v1127
        %v1130 = vshrl.u32 %v1053, 16
        %v1132 = vrot.slane %v1130, 4
        %v1133 = vshll.u32 %v1053, 16
        %v1135 = vrot.slane %v1133, 5
        %v1136 = vor.u32 %v1132, %v1135
        %v1137 = vrot.slane %v1136, 4
        %v1139 = vshll.u32 %v1054, 16
        %v1141 = vrot.slane %v1139, 5
        %v1142 = vsel %vm338, %v1137, %v1141
        %v1144 = vshrl.u32 %v1055, 16
        %v1146 = vrot.slane %v1144, 4
        %v1147 = vshll.u32 %v1055, 16
        %v1149 = vrot.slane %v1147, 5
        %v1150 = vor.u32 %v1146, %v1149
        %v1151 = vrot.slane %v1150, 4
        %v1153 = vshll.u32 %v1056, 16
        %v1155 = vrot.slane %v1153, 5
        %v1156 = vsel %vm338, %v1151, %v1155
        %v1158 = vshrl.u32 %v1057, 16
        %v1160 = vrot.slane %v1158, 4
        %v1161 = vshll.u32 %v1057, 16
        %v1163 = vrot.slane %v1161, 5
        %v1164 = vor.u32 %v1160, %v1163
        %v1165 = vrot.slane %v1164, 4
        %v1167 = vshll.u32 %v1058, 16
        %v1169 = vrot.slane %v1167, 5
        %v1170 = vsel %vm338, %v1165, %v1169
        %s1171 = scalar_lea.vmem %s1, 16
        %v1172 = vld [vmem:[%s1171] sm:$0x3]
        %v1173 = vunpack.c.l.b16 %v1072
        %v1174 = vunpack.c.l.b16 %v1086
        %v1175 = vunpack.c.l.b16 %v1100
        %v1176 = vunpack.c.l.b16 %v1114
        %v1177 = vunpack.c.l.b16 %v1128
        %v1178 = vunpack.c.l.b16 %v1142
        %v1179 = vunpack.c.l.b16 %v1156
        %v1180 = vunpack.c.l.b16 %v1170
        %v1181 = vpack.c.b16 %v1174, %v1173
        %v1182 = vpack.c.b16 %v1176, %v1175
        %v1183 = vpack.c.b16 %v1178, %v1177
        %v1184 = vpack.c.b16 %v1180, %v1179
        %v1186 = vsel %vm210, %v1181, 0
        %v1189 = vsel %vm210, %v1182, 0
        %v1192 = vsel %vm210, %v1183, 0
        %v1195 = vsel %vm210, %v1184, 0
        %v1198 = vsel %vm223, %v1172, 0
        %1200 = vmatpush.bf16.msra.mxu0 0
        %1201 = vmatpush.bf16.msra.mxu0 0
        %1202 = vmatpush.bf16.msra.mxu0 0
        %1203 = vmatpush.bf16.msra.mxu0 0
        %1204 = vmatpush.bf16.msra.mxu0 0
        %1205 = vmatpush.bf16.msra.mxu0 0
        %1206 = vmatpush.bf16.msra.mxu0 0
        %1207 = vmatpush.bf16.msra.mxu0 %v1198
        %1208 = vmatmul.bf16.gmra.mxu0 %v1186
        %v1209 = vpop.f32.mrf.mxu0
        %v1210 = vadd.f32 0.0, %v1209
        %v1211 = vpop.f32.mrf.mxu0
        %v1212 = vadd.f32 0.0, %v1211
        %1213 = vmatmul.bf16.gmra.mxu0 %v1189
        %v1214 = vpop.f32.mrf.mxu0
        %v1215 = vadd.f32 0.0, %v1214
        %v1216 = vpop.f32.mrf.mxu0
        %v1217 = vadd.f32 0.0, %v1216
        %1218 = vmatmul.bf16.gmra.mxu0 %v1192
        %v1219 = vpop.f32.mrf.mxu0
        %v1220 = vadd.f32 0.0, %v1219
        %v1221 = vpop.f32.mrf.mxu0
        %v1222 = vadd.f32 0.0, %v1221
        %1223 = vmatmul.bf16.gmra.mxu0 %v1195
        %v1224 = vpop.f32.mrf.mxu0
        %v1225 = vadd.f32 0.0, %v1224
        %v1226 = vpop.f32.mrf.mxu0
        %v1227 = vadd.f32 0.0, %v1226
        %1228 = vdwg.mxu0
        %v1229 = vadd.f32 %v1035, %v1210
        %v1230 = vadd.f32 %v1036, %v1212
        %v1231 = vadd.f32 %v1037, %v1215
        %v1232 = vadd.f32 %v1038, %v1217
        %v1233 = vadd.f32 %v1039, %v1220
        %v1234 = vadd.f32 %v1040, %v1222
        %v1235 = vadd.f32 %v1041, %v1225
        %v1236 = vadd.f32 %v1042, %v1227
        %v1237 = vld [vmem:[%s2] sm:$0x1]
        %v1239 = vperm.slane %v1237, 0
        %v1241 = vadd.f32 %v1229, %v1239
        %v1242 = vadd.f32 %v1230, %v1239
        %v1243 = vadd.f32 %v1231, %v1239
        %v1244 = vadd.f32 %v1232, %v1239
        %v1245 = vadd.f32 %v1233, %v1239
        %v1246 = vadd.f32 %v1234, %v1239
        %v1247 = vadd.f32 %v1235, %v1239
        %v1248 = vadd.f32 %v1236, %v1239
        %1249 = vst [vmem:[%s163] sm:$0xff] %v1241
        %1250 = vst [vmem:[%s163 + $0x8] sm:$0xff] %v1242
        %1251 = vst [vmem:[%s163 + $0x10] sm:$0xff] %v1243
        %1252 = vst [vmem:[%s163 + $0x18] sm:$0xff] %v1244
        %1253 = vst [vmem:[%s163 + $0x20] sm:$0xff] %v1245
        %1254 = vst [vmem:[%s163 + $0x28] sm:$0xff] %v1246
        %1255 = vst [vmem:[%s163 + $0x30] sm:$0xff] %v1247
        %1256 = vst [vmem:[%s163 + $0x38] sm:$0xff] %v1248
        %s1257 = sand.u32 %s93, 1
        %s1258 = scalar_lea.sflag [#allocation3], %s1257
        %s1259 = sand.u32 %s93, 1
        %s1260 = smul.addr %s1259, 64
        %s1261 = scalar_lea.vmem [#allocation2], %s1260
        // Predicated region
        $region33: #{tpu_custom_call.1} parent=31 // pred_check
          %p1262 = pneg %p103
        $region34: #{tpu_custom_call.1} parent=31 // pred_check_branch
          %1264 = sbr.rel (%p1262) target = $region36
        $region35: #{tpu_custom_call.1} parent=31 // pred_region
          %1266 = vsyncadd %s1258, 0
          %s1267 = smul.addr %s17, 8
          %s1268 = smul.addr %s1267, 8
          %s1269 = scalar_lea.hbm %s3, %s1268
          %s1270 = sshll.u32 %s1261, 4
          %s1271 = int_to_ptr.vmem [resolvable:$true] %s1270
          %s1272 = sshll.u32 %s1269, 4
          %s1273 = int_to_ptr.hbm [resolvable:$true] %s1272
          %1278 = dma.vmem_to_hbm [thread:$0]  %s1271, 1024, %s1273, %s1258, 128, 128, 8
        $region36: #{tpu_custom_call.1} parent=31 // pred_fallthru
          _
      $region32: #{tpu_custom_call.1} parent=5 // pred_fallthru
        _
      %p1279 = scmp.le.s32.totalorder 2, %s12
      // Predicated region
      $region37: #{tpu_custom_call.1} parent=5 // pred_check
        %p1280 = pneg %p1279
      $region38: #{tpu_custom_call.1} parent=5 // pred_check_branch
        %1282 = sbr.rel (%p1280) target = $region40
      $region39: #{tpu_custom_call.1} parent=5 // pred_region
        %s1283 = ssub.s32 %s12, 2
        // Predicated region
        $region41: #{tpu_custom_call.1} parent=39 // pred_check
          %p1284 = pneg %p109
        $region42: #{tpu_custom_call.1} parent=39 // pred_check_branch
          %1286 = sbr.rel (%p1284) target = $region44
        $region43: #{tpu_custom_call.1} parent=39 // pred_region
          %s1287 = sand.u32 %s94, 1
          %s1288 = scalar_lea.sflag [#allocation3], %s1287
          %s1289 = sand.u32 %s94, 1
          %s1290 = smul.addr %s1289, 64
          %s1291 = scalar_lea.vmem [#allocation2], %s1290
          %1293 = dma.done %s1288, 1024
        $region44: #{tpu_custom_call.1} parent=39 // pred_fallthru
          _
      $region40: #{tpu_custom_call.1} parent=5 // pred_fallthru
        _
    $region6: #{tpu_custom_call.1} parent=1 // loop_footer
      %s16 = sadd.s32 1, %s12
    $region7: #{tpu_custom_call.1} parent=1 // loop_footer_branch
      %11 = sbr.rel target = $region3
    $region8: #{tpu_custom_call.1} parent=1 // loop_exit
      _
    %1294 = vsyncpa [#allocation3], 1
    %s1295 = scalar_lea.sflag [#allocation3], 1
    %1296 = vsyncpa %s1295, 1

</llo_original>
